<compile_context>
chip_gen: v7x
topology: tpu7x:2x2x1
jax: 0.10.0
libtpu: 0.0.40
codegen_flags: <defaults>
</compile_context>

<pallas_src>
import functools

import jax
import jax.numpy as jnp
from jax.experimental import pallas as pl
from jax.experimental.pallas import tpu as pltpu


def _single_conv_kernel(x_ref, w_ref, ss_ref, m_ref, o_ref, p_ref, *, W):
    # x_ref : (1, Cin, HW)   f32   one image, spatial flattened into lanes
    # w_ref : (Cout, 9*Cin)  bf16  weights flattened in (kh, kw, cin) minor order
    # ss_ref: (2, Cout, 1)   f32   [0] = BN scale, [1] = BN shift (incl. conv bias)
    # m_ref : (2, 1, HW)     f32   [0] = column mask for dw=-1, [1] = mask for dw=+1
    # o_ref : (1, Cout, HW)  f32   NCHW-compatible output block (lane-dense)
    # p_ref : (9*Cin, HW)    f32   scratch im2col patch matrix
    Cin = x_ref.shape[1]
    HW = x_ref.shape[2]

    # Zero the patch matrix: columns that are never written below implement the
    # zero padding of Conv2d(padding=1).
    p_ref[...] = jnp.zeros_like(p_ref)

    # Assemble the im2col patch matrix from 9 statically shifted copies of x.
    # For tap (kh, kw) with (dh, dw) = (kh-1, kw-1):
    #   P[t*Cin + ci, p] = x[ci, p + dh*W + dw]   when the neighbour is in-image,
    #                       0                      otherwise.
    # Vertical out-of-range is handled by trimming the destination column range;
    # horizontal wrap-around is killed by the per-column masks.
    for kh in range(3):
        for kw in range(3):
            t = kh * 3 + kw
            dh, dw = kh - 1, kw - 1
            s = dh * W + dw                      # shift in flattened (h*W + w)
            dst0 = max(0, -s)
            src0 = max(0, s)
            L = HW - abs(s)
            val = x_ref[0, :, src0:src0 + L]     # (Cin, L)
            if dw == -1:
                val = val * m_ref[0, 0:1, dst0:dst0 + L]
            elif dw == 1:
                val = val * m_ref[1, 0:1, dst0:dst0 + L]
            p_ref[t * Cin:(t + 1) * Cin, dst0:dst0 + L] = val

    # Single MXU matmul: (Cout, 9*Cin) @ (9*Cin, HW), bf16 inputs, f32 accumulation.
    acc = jnp.dot(w_ref[...], p_ref[...].astype(jnp.bfloat16),
                  preferred_element_type=jnp.float32)

    # Fused BN(eval) + ReLU epilogue in f32 (per-output-channel scale/shift).
    y = acc * ss_ref[0] + ss_ref[1]
    o_ref[0] = jnp.maximum(y, 0.0).astype(o_ref.dtype)


def single_conv_forward(x_nchw, w_oihw, conv_bias, bn_gamma, bn_beta,
                        bn_mean, bn_var, eps=1e-5):
    """x: (N, Cin, H, W) f32, w: (Cout, Cin, 3, 3) -> (N, Cout, H, W) f32."""
    N, Cin, H, W = x_nchw.shape
    Cout = w_oihw.shape[0]
    HW = H * W

    # Free reshape: NCHW already has spatial minor, so H*W lands in the lane dim.
    x_flat = x_nchw.reshape(N, Cin, HW).astype(jnp.float32)

    # (Cout, Cin, 3, 3) -> (Cout, 3, 3, Cin) -> (Cout, 9*Cin); bf16 for the MXU.
    w_mat = jnp.transpose(w_oihw, (0, 2, 3, 1)).reshape(Cout, 9 * Cin)
    w_mat = w_mat.astype(jnp.bfloat16)

    # Fold conv bias + BatchNorm(eval) into per-channel scale/shift:
    #   bn(conv + b) = conv * s + ((b - mean) * s + beta),  s = gamma / sqrt(var+eps)
    s = bn_gamma / jnp.sqrt(bn_var + eps)
    t = (conv_bias - bn_mean) * s + bn_beta
    ss = jnp.stack([s, t]).reshape(2, Cout, 1).astype(jnp.float32)

    # Column-validity masks for the horizontal taps (dw = -1 / +1).
    col = jnp.arange(HW, dtype=jnp.int32) % W
    masks = jnp.stack([(col != 0), (col != W - 1)]).astype(jnp.float32)
    masks = masks.reshape(2, 1, HW)

    kernel = functools.partial(_single_conv_kernel, W=W)
    out = pl.pallas_call(
        kernel,
        out_shape=jax.ShapeDtypeStruct((N, Cout, HW), jnp.float32),
        grid_spec=pltpu.PrefetchScalarGridSpec(
            num_scalar_prefetch=0,
            grid=(N,),
            in_specs=[
                pl.BlockSpec((1, Cin, HW), lambda n: (n, 0, 0)),       # x (per image)
                pl.BlockSpec((Cout, 9 * Cin), lambda n: (0, 0)),       # weights
                pl.BlockSpec((2, Cout, 1), lambda n: (0, 0, 0)),       # scale/shift
                pl.BlockSpec((2, 1, HW), lambda n: (0, 0, 0)),         # column masks
            ],
            out_specs=pl.BlockSpec((1, Cout, HW), lambda n: (n, 0, 0)),
            scratch_shapes=[pltpu.VMEM((9 * Cin, HW), jnp.float32)],
        ),
        compiler_params=pltpu.CompilerParams(
            dimension_semantics=("parallel",)),
    )(x_flat, w_mat, ss, masks)

    # Free reshape back to NCHW -- no transpose, no extra HBM pass.
    return out.reshape(N, Cout, H, W)


if __name__ == "__main__":
    # Shapes consistent with SingleConv(in_channels=4, out_channels=8, kernelsize=3)
    N, Cin, H, W = 2, 4, 16, 16
    Cout = 8

    key = jax.random.PRNGKey(0)
    kx, kw, kb, kg, kbe, km, kv = jax.random.split(key, 7)

    x = jax.random.normal(kx, (N, Cin, H, W), dtype=jnp.float32)
    w_oihw = jax.random.normal(kw, (Cout, Cin, 3, 3), dtype=jnp.float32) * 0.1
    conv_bias = jax.random.normal(kb, (Cout,), dtype=jnp.float32) * 0.1
    bn_gamma = 1.0 + 0.1 * jax.random.normal(kg, (Cout,), dtype=jnp.float32)
    bn_beta = 0.1 * jax.random.normal(kbe, (Cout,), dtype=jnp.float32)
    bn_mean = 0.1 * jax.random.normal(km, (Cout,), dtype=jnp.float32)
    bn_var = jnp.abs(1.0 + 0.1 * jax.random.normal(kv, (Cout,), dtype=jnp.float32))

    out = single_conv_forward(x, w_oihw, conv_bias, bn_gamma, bn_beta,
                              bn_mean, bn_var)
    jax.block_until_ready(out)
    assert out.shape == (N, Cout, H, W), out.shape

    # Reference with the same bf16 rounding of the matmul inputs, f32 accumulation.
    conv_ref = jax.lax.conv_general_dilated(
        x.astype(jnp.bfloat16), w_oihw.astype(jnp.bfloat16),
        window_strides=(1, 1), padding=((1, 1), (1, 1)),
        dimension_numbers=("NCHW", "OIHW", "NCHW"),
        preferred_element_type=jnp.float32)
    s_ref = bn_gamma / jnp.sqrt(bn_var + 1e-5)
    t_ref = (conv_bias - bn_mean) * s_ref + bn_beta
    ref = jnp.maximum(
        conv_ref * s_ref[None, :, None, None] + t_ref[None, :, None, None], 0.0)
    max_err = float(jnp.max(jnp.abs(out - ref)))
    assert max_err < 1e-2, f"max abs error vs reference: {max_err}"
    print("KERNEL_OK")
</pallas_src>

<mosaic_0001>
module attributes {stable_mosaic.version = 11 : i64} {
  func.func @_single_conv_kernel(%arg0: i32, %arg1: memref<1x4x256xf32, #tpu.memory_space<vmem>>, %arg2: memref<8x36xbf16, #tpu.memory_space<vmem>>, %arg3: memref<2x8x1xf32, #tpu.memory_space<vmem>>, %arg4: memref<2x1x256xf32, #tpu.memory_space<vmem>>, %arg5: memref<1x8x256xf32, #tpu.memory_space<vmem>>, %arg6: memref<36x256xf32, #tpu.memory_space<vmem>>) attributes {dimension_semantics = [#tpu.dimension_semantics<parallel>], iteration_bounds = array<i64: 2>, scalar_prefetch = 0 : i64, scratch_operands = 1 : i64, tpu.core_type = #tpu.core_type<tc>, window_params = [{transform_indices = @transform_0, window_bounds = array<i64: 1, 4, 256>}, {pipeline_mode = #tpu.pipeline_mode<synchronous>, transform_indices = @transform_1, window_bounds = array<i64: 8, 36>}, {pipeline_mode = #tpu.pipeline_mode<synchronous>, transform_indices = @transform_2, window_bounds = array<i64: 2, 8, 1>}, {pipeline_mode = #tpu.pipeline_mode<synchronous>, transform_indices = @transform_3, window_bounds = array<i64: 2, 1, 256>}, {transform_indices = @transform_4, window_bounds = array<i64: 1, 8, 256>}]} {
    %cst = arith.constant 0.000000e+00 : f32
    %0 = vector.broadcast %cst : f32 to vector<36x256xf32>
    %c0 = arith.constant 0 : index
    %c0_0 = arith.constant 0 : index
    %1 = vector.load %arg6[%c0, %c0_0] : memref<36x256xf32, #tpu.memory_space<vmem>>, vector<36x256xf32>
    tpu.vector_store %arg6[%c0, %c0_0], %0 {strides = array<i32>} : memref<36x256xf32, #tpu.memory_space<vmem>>, vector<36x256xf32>,
    %c0_1 = arith.constant 0 : index
    %c0_2 = arith.constant 0 : index
    %c0_3 = arith.constant 0 : index
    %2 = vector.load %arg1[%c0_1, %c0_2, %c0_3] : memref<1x4x256xf32, #tpu.memory_space<vmem>>, vector<1x4x239xf32>
    %3 = vector.shape_cast %2 : vector<1x4x239xf32> to vector<4x239xf32>
    %c0_4 = arith.constant 0 : index
    %c0_5 = arith.constant 0 : index
    %c17 = arith.constant 17 : index
    %4 = vector.load %arg4[%c0_4, %c0_5, %c17] : memref<2x1x256xf32, #tpu.memory_space<vmem>>, vector<1x1x239xf32>
    %5 = vector.shape_cast %4 : vector<1x1x239xf32> to vector<1x239xf32>
    %6 = vector.broadcast %5 : vector<1x239xf32> to vector<4x239xf32>
    %7 = arith.mulf %3, %6 : vector<4x239xf32>
    %c0_6 = arith.constant 0 : index
    %c17_7 = arith.constant 17 : index
    %8 = vector.load %arg6[%c0_6, %c17_7] : memref<36x256xf32, #tpu.memory_space<vmem>>, vector<4x239xf32>
    tpu.vector_store %arg6[%c0_6, %c17_7], %7 {strides = array<i32>} : memref<36x256xf32, #tpu.memory_space<vmem>>, vector<4x239xf32>,
    %c0_8 = arith.constant 0 : index
    %c0_9 = arith.constant 0 : index
    %c0_10 = arith.constant 0 : index
    %9 = vector.load %arg1[%c0_8, %c0_9, %c0_10] : memref<1x4x256xf32, #tpu.memory_space<vmem>>, vector<1x4x240xf32>
    %10 = vector.shape_cast %9 : vector<1x4x240xf32> to vector<4x240xf32>
    %c4 = arith.constant 4 : index
    %c16 = arith.constant 16 : index
    %11 = vector.load %arg6[%c4, %c16] : memref<36x256xf32, #tpu.memory_space<vmem>>, vector<4x240xf32>
    tpu.vector_store %arg6[%c4, %c16], %10 {strides = array<i32>} : memref<36x256xf32, #tpu.memory_space<vmem>>, vector<4x240xf32>,
    %c0_11 = arith.constant 0 : index
    %c0_12 = arith.constant 0 : index
    %c0_13 = arith.constant 0 : index
    %12 = vector.load %arg1[%c0_11, %c0_12, %c0_13] : memref<1x4x256xf32, #tpu.memory_space<vmem>>, vector<1x4x241xf32>
    %13 = vector.shape_cast %12 : vector<1x4x241xf32> to vector<4x241xf32>
    %c1 = arith.constant 1 : index
    %c0_14 = arith.constant 0 : index
    %c15 = arith.constant 15 : index
    %14 = vector.load %arg4[%c1, %c0_14, %c15] : memref<2x1x256xf32, #tpu.memory_space<vmem>>, vector<1x1x241xf32>
    %15 = vector.shape_cast %14 : vector<1x1x241xf32> to vector<1x241xf32>
    %16 = vector.broadcast %15 : vector<1x241xf32> to vector<4x241xf32>
    %17 = arith.mulf %13, %16 : vector<4x241xf32>
    %c8 = arith.constant 8 : index
    %c15_15 = arith.constant 15 : index
    %18 = vector.load %arg6[%c8, %c15_15] : memref<36x256xf32, #tpu.memory_space<vmem>>, vector<4x241xf32>
    tpu.vector_store %arg6[%c8, %c15_15], %17 {strides = array<i32>} : memref<36x256xf32, #tpu.memory_space<vmem>>, vector<4x241xf32>,
    %c0_16 = arith.constant 0 : index
    %c0_17 = arith.constant 0 : index
    %c0_18 = arith.constant 0 : index
    %19 = vector.load %arg1[%c0_16, %c0_17, %c0_18] : memref<1x4x256xf32, #tpu.memory_space<vmem>>, vector<1x4x255xf32>
    %20 = vector.shape_cast %19 : vector<1x4x255xf32> to vector<4x255xf32>
    %c0_19 = arith.constant 0 : index
    %c0_20 = arith.constant 0 : index
    %c1_21 = arith.constant 1 : index
    %21 = vector.load %arg4[%c0_19, %c0_20, %c1_21] : memref<2x1x256xf32, #tpu.memory_space<vmem>>, vector<1x1x255xf32>
    %22 = vector.shape_cast %21 : vector<1x1x255xf32> to vector<1x255xf32>
    %23 = vector.broadcast %22 : vector<1x255xf32> to vector<4x255xf32>
    %24 = arith.mulf %20, %23 : vector<4x255xf32>
    %c12 = arith.constant 12 : index
    %c1_22 = arith.constant 1 : index
    %25 = vector.load %arg6[%c12, %c1_22] : memref<36x256xf32, #tpu.memory_space<vmem>>, vector<4x255xf32>
    tpu.vector_store %arg6[%c12, %c1_22], %24 {strides = array<i32>} : memref<36x256xf32, #tpu.memory_space<vmem>>, vector<4x255xf32>,
    %c0_23 = arith.constant 0 : index
    %c0_24 = arith.constant 0 : index
    %c0_25 = arith.constant 0 : index
    %26 = vector.load %arg1[%c0_23, %c0_24, %c0_25] : memref<1x4x256xf32, #tpu.memory_space<vmem>>, vector<1x4x256xf32>
    %27 = vector.shape_cast %26 : vector<1x4x256xf32> to vector<4x256xf32>
    %c16_26 = arith.constant 16 : index
    %c0_27 = arith.constant 0 : index
    %28 = vector.load %arg6[%c16_26, %c0_27] : memref<36x256xf32, #tpu.memory_space<vmem>>, vector<4x256xf32>
    tpu.vector_store %arg6[%c16_26, %c0_27], %27 {strides = array<i32>} : memref<36x256xf32, #tpu.memory_space<vmem>>, vector<4x256xf32>,
    %c0_28 = arith.constant 0 : index
    %c0_29 = arith.constant 0 : index
    %c1_30 = arith.constant 1 : index
    %29 = vector.load %arg1[%c0_28, %c0_29, %c1_30] : memref<1x4x256xf32, #tpu.memory_space<vmem>>, vector<1x4x255xf32>
    %30 = vector.shape_cast %29 : vector<1x4x255xf32> to vector<4x255xf32>
    %c1_31 = arith.constant 1 : index
    %c0_32 = arith.constant 0 : index
    %c0_33 = arith.constant 0 : index
    %31 = vector.load %arg4[%c1_31, %c0_32, %c0_33] : memref<2x1x256xf32, #tpu.memory_space<vmem>>, vector<1x1x255xf32>
    %32 = vector.shape_cast %31 : vector<1x1x255xf32> to vector<1x255xf32>
    %33 = vector.broadcast %32 : vector<1x255xf32> to vector<4x255xf32>
    %34 = arith.mulf %30, %33 : vector<4x255xf32>
    %c20 = arith.constant 20 : index
    %c0_34 = arith.constant 0 : index
    %35 = vector.load %arg6[%c20, %c0_34] : memref<36x256xf32, #tpu.memory_space<vmem>>, vector<4x255xf32>
    tpu.vector_store %arg6[%c20, %c0_34], %34 {strides = array<i32>} : memref<36x256xf32, #tpu.memory_space<vmem>>, vector<4x255xf32>,
    %c0_35 = arith.constant 0 : index
    %c0_36 = arith.constant 0 : index
    %c15_37 = arith.constant 15 : index
    %36 = vector.load %arg1[%c0_35, %c0_36, %c15_37] : memref<1x4x256xf32, #tpu.memory_space<vmem>>, vector<1x4x241xf32>
    %37 = vector.shape_cast %36 : vector<1x4x241xf32> to vector<4x241xf32>
    %c0_38 = arith.constant 0 : index
    %c0_39 = arith.constant 0 : index
    %c0_40 = arith.constant 0 : index
    %38 = vector.load %arg4[%c0_38, %c0_39, %c0_40] : memref<2x1x256xf32, #tpu.memory_space<vmem>>, vector<1x1x241xf32>
    %39 = vector.shape_cast %38 : vector<1x1x241xf32> to vector<1x241xf32>
    %40 = vector.broadcast %39 : vector<1x241xf32> to vector<4x241xf32>
    %41 = arith.mulf %37, %40 : vector<4x241xf32>
    %c24 = arith.constant 24 : index
    %c0_41 = arith.constant 0 : index
    %42 = vector.load %arg6[%c24, %c0_41] : memref<36x256xf32, #tpu.memory_space<vmem>>, vector<4x241xf32>
    tpu.vector_store %arg6[%c24, %c0_41], %41 {strides = array<i32>} : memref<36x256xf32, #tpu.memory_space<vmem>>, vector<4x241xf32>,
    %c0_42 = arith.constant 0 : index
    %c0_43 = arith.constant 0 : index
    %c16_44 = arith.constant 16 : index
    %43 = vector.load %arg1[%c0_42, %c0_43, %c16_44] : memref<1x4x256xf32, #tpu.memory_space<vmem>>, vector<1x4x240xf32>
    %44 = vector.shape_cast %43 : vector<1x4x240xf32> to vector<4x240xf32>
    %c28 = arith.constant 28 : index
    %c0_45 = arith.constant 0 : index
    %45 = vector.load %arg6[%c28, %c0_45] : memref<36x256xf32, #tpu.memory_space<vmem>>, vector<4x240xf32>
    tpu.vector_store %arg6[%c28, %c0_45], %44 {strides = array<i32>} : memref<36x256xf32, #tpu.memory_space<vmem>>, vector<4x240xf32>,
    %c0_46 = arith.constant 0 : index
    %c0_47 = arith.constant 0 : index
    %c17_48 = arith.constant 17 : index
    %46 = vector.load %arg1[%c0_46, %c0_47, %c17_48] : memref<1x4x256xf32, #tpu.memory_space<vmem>>, vector<1x4x239xf32>
    %47 = vector.shape_cast %46 : vector<1x4x239xf32> to vector<4x239xf32>
    %c1_49 = arith.constant 1 : index
    %c0_50 = arith.constant 0 : index
    %c0_51 = arith.constant 0 : index
    %48 = vector.load %arg4[%c1_49, %c0_50, %c0_51] : memref<2x1x256xf32, #tpu.memory_space<vmem>>, vector<1x1x239xf32>
    %49 = vector.shape_cast %48 : vector<1x1x239xf32> to vector<1x239xf32>
    %50 = vector.broadcast %49 : vector<1x239xf32> to vector<4x239xf32>
    %51 = arith.mulf %47, %50 : vector<4x239xf32>
    %c32 = arith.constant 32 : index
    %c0_52 = arith.constant 0 : index
    %52 = vector.load %arg6[%c32, %c0_52] : memref<36x256xf32, #tpu.memory_space<vmem>>, vector<4x239xf32>
    tpu.vector_store %arg6[%c32, %c0_52], %51 {strides = array<i32>} : memref<36x256xf32, #tpu.memory_space<vmem>>, vector<4x239xf32>,
    %c0_53 = arith.constant 0 : index
    %c0_54 = arith.constant 0 : index
    %53 = vector.load %arg2[%c0_53, %c0_54] : memref<8x36xbf16, #tpu.memory_space<vmem>>, vector<8x36xbf16>
    %c0_55 = arith.constant 0 : index
    %c0_56 = arith.constant 0 : index
    %54 = vector.load %arg6[%c0_55, %c0_56] : memref<36x256xf32, #tpu.memory_space<vmem>>, vector<36x256xf32>
    %55 = arith.truncf %54 : vector<36x256xf32> to vector<36x256xbf16>
    %cst_57 = arith.constant dense<0.000000e+00> : vector<8x256xf32>
    %56 = tpu.matmul %53, %55, %cst_57 {dimension_numbers = #tpu.dot_dimension_numbers<[1], [0], [0], [1], [0, 0, 1, 1], [], []>} : vector<8x36xbf16>, vector<36x256xbf16>, vector<8x256xf32> -> vector<8x256xf32>
    %c0_58 = arith.constant 0 : index
    %c0_59 = arith.constant 0 : index
    %c0_60 = arith.constant 0 : index
    %57 = vector.load %arg3[%c0_58, %c0_59, %c0_60] : memref<2x8x1xf32, #tpu.memory_space<vmem>>, vector<1x8x1xf32>
    %58 = vector.shape_cast %57 : vector<1x8x1xf32> to vector<8x1xf32>
    %59 = vector.broadcast %58 : vector<8x1xf32> to vector<8x256xf32>
    %60 = arith.mulf %56, %59 : vector<8x256xf32>
    %c1_61 = arith.constant 1 : index
    %c0_62 = arith.constant 0 : index
    %c0_63 = arith.constant 0 : index
    %61 = vector.load %arg3[%c1_61, %c0_62, %c0_63] : memref<2x8x1xf32, #tpu.memory_space<vmem>>, vector<1x8x1xf32>
    %62 = vector.shape_cast %61 : vector<1x8x1xf32> to vector<8x1xf32>
    %63 = vector.broadcast %62 : vector<8x1xf32> to vector<8x256xf32>
    %64 = arith.addf %60, %63 : vector<8x256xf32>
    %cst_64 = arith.constant 0.000000e+00 : f32
    %65 = vector.broadcast %cst_64 : f32 to vector<8x256xf32>
    %66 = arith.maximumf %64, %65 : vector<8x256xf32>
    %c0_65 = arith.constant 0 : index
    %c0_66 = arith.constant 0 : index
    %c0_67 = arith.constant 0 : index
    %67 = vector.load %arg5[%c0_65, %c0_66, %c0_67] : memref<1x8x256xf32, #tpu.memory_space<vmem>>, vector<1x8x256xf32>
    %68 = vector.shape_cast %67 : vector<1x8x256xf32> to vector<8x256xf32>
    %69 = vector.shape_cast %66 : vector<8x256xf32> to vector<1x8x256xf32>
    tpu.vector_store %arg5[%c0_65, %c0_66, %c0_67], %69 {strides = array<i32>} : memref<1x8x256xf32, #tpu.memory_space<vmem>>, vector<1x8x256xf32>,
    return
  }
  func.func @transform_0(%arg0: i32) -> (i32, i32, i32) {
    %c0_i32 = arith.constant 0 : i32
    %c0_i32_0 = arith.constant 0 : i32
    %c0_i32_1 = arith.constant 0 : i32
    return %arg0, %c0_i32, %c0_i32_0 : i32, i32, i32
  }
  func.func @transform_1(%arg0: i32) -> (i32, i32) {
    %c0_i32 = arith.constant 0 : i32
    %c0_i32_0 = arith.constant 0 : i32
    %c0_i32_1 = arith.constant 0 : i32
    return %c0_i32, %c0_i32_0 : i32, i32
  }
  func.func @transform_2(%arg0: i32) -> (i32, i32, i32) {
    %c0_i32 = arith.constant 0 : i32
    %c0_i32_0 = arith.constant 0 : i32
    %c0_i32_1 = arith.constant 0 : i32
    %c0_i32_2 = arith.constant 0 : i32
    return %c0_i32, %c0_i32_0, %c0_i32_1 : i32, i32, i32
  }
  func.func @transform_3(%arg0: i32) -> (i32, i32, i32) {
    %c0_i32 = arith.constant 0 : i32
    %c0_i32_0 = arith.constant 0 : i32
    %c0_i32_1 = arith.constant 0 : i32
    %c0_i32_2 = arith.constant 0 : i32
    return %c0_i32, %c0_i32_0, %c0_i32_1 : i32, i32, i32
  }
  func.func @transform_4(%arg0: i32) -> (i32, i32, i32) {
    %c0_i32 = arith.constant 0 : i32
    %c0_i32_0 = arith.constant 0 : i32
    %c0_i32_1 = arith.constant 0 : i32
    return %arg0, %c0_i32, %c0_i32_0 : i32, i32, i32
  }
}

</mosaic_0001>

<llo_original>
// kernel: tpu_custom_call.1
$region0: #{tpu_custom_call.1}
  #allocation0 [shape = 'u32[]', space=smem, size = 0x4, offset = 0x4, fixed_abs, tag = 'smem constant byte address 0x4 - core index']
  #allocation1 [shape = 'u32[144,128]{1,0:T(1,128)}', space=vmem, size = 0x12000, scoped, tag = 'internal scratch']
  #allocation2 [shape = 'f32[36,256]{1,0:T(8,128)}', space=vmem, size = 0xa000, scoped, tag = 'scratch operand']
  %s0 = inlined_call_operand.vmem [shape: f32[2,4,256], index: 0, kind: input, shape index: {}]
  %s1 = inlined_call_operand.vmem [shape: bf16[8,36], index: 1, kind: input, shape index: {}]
  %s2 = inlined_call_operand.vmem [shape: f32[2,8,1], index: 2, kind: input, shape index: {}]
  %s3 = inlined_call_operand.vmem [shape: f32[2,1,256], index: 3, kind: input, shape index: {}]
  %s4 = inlined_call_operand.hbm [shape: f32[2,8,256], index: 4, kind: output, shape index: {}]
  %s5 = sld [smem:[#allocation0]]
  $region49: #{tpu_custom_call.1} parent=0
    _
  %s7 = ssub.s32 1, %s5
  %s8 = scalar_select 0, %s7, %s5
  $region1: #{tpu_custom_call.1} parent=0
    #allocation3 [shape = 'u8[16384]{0}', space=vmem, size = 0x4000, scoped, tag = 'output window, operand 0']
    #allocation4 [shape = 's32[2]{0}', space=sflag, size = 0x8, scoped, tag = 'scoped memory for tpu_custom_call.1']
    %9 = vsyncpa [#allocation4], 0
    %s10 = scalar_lea.sflag [#allocation4], 1
    %11 = vsyncpa %s10, 0
    loop: start=0, step=1, limit=4
    $region2: #{tpu_custom_call.1} parent=1 // loop_pre_header
      _
    $region3: #{tpu_custom_call.1} parent=1 // loop_header
      %s13 = sphi 0, %s17
      %p14 = scmp.ge.s32.totalorder %s13, 4
      %s23 = sphi 0, %s25
      %s26 = sphi 0, %s23
      %s27 = sphi 0, %s26
      %s43 = sphi 0, %s27
      %s47 = sphi 0, %s47
      %s49 = sphi 0, %s47
      %s50 = sphi 0, %s49
      %s64 = sphi 0, %s50
      %s68 = sphi 0, %s68
      %s70 = sphi 0, %s68
      %s71 = sphi 0, %s70
      %s85 = sphi 0, %s71
      %s89 = sphi 0, %s89
      %s91 = sphi 0, %s89
      %s92 = sphi 0, %s91
      %s106 = sphi 0, %s92
      %s112 = sphi 0, %s114
      %s115 = sphi 0, %s112
      %s116 = sphi 0, %s115
      %s132 = sphi 0, %s116
    $region4: #{tpu_custom_call.1} parent=1 // loop_header_branch
      %16 = sbr.rel (%p14) target = $region8
    $region5: #{tpu_custom_call.1} parent=1 // loop_body
      %s18 = ssub.s32 %s13, 1
      %s19 = ssub.s32 %s13, 2
      %s20 = sadd.s32 %s13, 1
      %s21 = ssub.s32 %s13, %s20
      %p22 = scmp.eq.s32.totalorder %s21, 0
      %s24 = sadd.s32 %s23, 1
      %s25 = scalar_select %p22, %s23, %s24
      %p28 = pneg %p22
      %p29 = scmp.eq.s32.totalorder %s13, 1
      %p30 = por %p28, %p29
      %p31 = scmp.ne.s32.totalorder %s23, %s26
      %p32 = scmp.eq.s32.totalorder %s13, 0
      %p33 = por %p31, %p32
      %p34 = scmp.ne.s32.totalorder %s23, %s26
      %p35 = scmp.eq.s32.totalorder %s18, 1
      %p36 = por %p34, %p35
      %p37 = scmp.ne.s32.totalorder %s26, %s27
      %p38 = scmp.eq.s32.totalorder %s18, 0
      %p39 = por %p37, %p38
      %p40 = scmp.ne.s32.totalorder %s26, %s27
      %p41 = scmp.eq.s32.totalorder %s19, 1
      %p42 = por %p40, %p41
      %p44 = scmp.ne.s32.totalorder %s27, %s43
      %p45 = scmp.eq.s32.totalorder %s19, 0
      %p46 = por %p44, %p45
      %s48 = sadd.s32 %s47, 1
      %p51 = scmp.eq.s32.totalorder %s13, 1
      %p52 = scmp.ne.s32.totalorder %s47, %s49
      %p53 = scmp.eq.s32.totalorder %s13, 0
      %p54 = por %p52, %p53
      %p55 = scmp.ne.s32.totalorder %s47, %s49
      %p56 = scmp.eq.s32.totalorder %s18, 1
      %p57 = por %p55, %p56
      %p58 = scmp.ne.s32.totalorder %s49, %s50
      %p59 = scmp.eq.s32.totalorder %s18, 0
      %p60 = por %p58, %p59
      %p61 = scmp.ne.s32.totalorder %s49, %s50
      %p62 = scmp.eq.s32.totalorder %s19, 1
      %p63 = por %p61, %p62
      %p65 = scmp.ne.s32.totalorder %s50, %s64
      %p66 = scmp.eq.s32.totalorder %s19, 0
      %p67 = por %p65, %p66
      %s69 = sadd.s32 %s68, 1
      %p72 = scmp.eq.s32.totalorder %s13, 1
      %p73 = scmp.ne.s32.totalorder %s68, %s70
      %p74 = scmp.eq.s32.totalorder %s13, 0
      %p75 = por %p73, %p74
      %p76 = scmp.ne.s32.totalorder %s68, %s70
      %p77 = scmp.eq.s32.totalorder %s18, 1
      %p78 = por %p76, %p77
      %p79 = scmp.ne.s32.totalorder %s70, %s71
      %p80 = scmp.eq.s32.totalorder %s18, 0
      %p81 = por %p79, %p80
      %p82 = scmp.ne.s32.totalorder %s70, %s71
      %p83 = scmp.eq.s32.totalorder %s19, 1
      %p84 = por %p82, %p83
      %p86 = scmp.ne.s32.totalorder %s71, %s85
      %p87 = scmp.eq.s32.totalorder %s19, 0
      %p88 = por %p86, %p87
      %s90 = sadd.s32 %s89, 1
      %p93 = scmp.eq.s32.totalorder %s13, 1
      %p94 = scmp.ne.s32.totalorder %s89, %s91
      %p95 = scmp.eq.s32.totalorder %s13, 0
      %p96 = por %p94, %p95
      %p97 = scmp.ne.s32.totalorder %s89, %s91
      %p98 = scmp.eq.s32.totalorder %s18, 1
      %p99 = por %p97, %p98
      %p100 = scmp.ne.s32.totalorder %s91, %s92
      %p101 = scmp.eq.s32.totalorder %s18, 0
      %p102 = por %p100, %p101
      %p103 = scmp.ne.s32.totalorder %s91, %s92
      %p104 = scmp.eq.s32.totalorder %s19, 1
      %p105 = por %p103, %p104
      %p107 = scmp.ne.s32.totalorder %s92, %s106
      %p108 = scmp.eq.s32.totalorder %s19, 0
      %p109 = por %p107, %p108
      %s110 = ssub.s32 %s13, %s20
      %p111 = scmp.eq.s32.totalorder %s110, 0
      %s113 = sadd.s32 %s112, 1
      %s114 = scalar_select %p111, %s112, %s113
      %p117 = pneg %p111
      %p118 = scmp.eq.s32.totalorder %s13, 1
      %p119 = por %p117, %p118
      %p120 = scmp.ne.s32.totalorder %s112, %s115
      %p121 = scmp.eq.s32.totalorder %s13, 0
      %p122 = por %p120, %p121
      %p123 = scmp.ne.s32.totalorder %s112, %s115
      %p124 = scmp.eq.s32.totalorder %s18, 1
      %p125 = por %p123, %p124
      %p126 = scmp.ne.s32.totalorder %s115, %s116
      %p127 = scmp.eq.s32.totalorder %s18, 0
      %p128 = por %p126, %p127
      %p129 = scmp.ne.s32.totalorder %s115, %s116
      %p130 = scmp.eq.s32.totalorder %s19, 1
      %p131 = por %p129, %p130
      %p133 = scmp.ne.s32.totalorder %s116, %s132
      %p134 = scmp.eq.s32.totalorder %s19, 0
      %p135 = por %p133, %p134
      %p136 = scmp.le.s32.totalorder 1, %s13
      %p137 = scmp.lt.s32.totalorder %s13, 3
      %p138 = pnand %p136, %p137
      %p139 = pneg %p138
      // Predicated region
      $region9: #{tpu_custom_call.1} parent=5 // pred_check
        _
      $region10: #{tpu_custom_call.1} parent=5 // pred_check_branch
        %141 = sbr.rel (%p138) target = $region12
      $region11: #{tpu_custom_call.1} parent=5 // pred_region
        %s142 = ssub.s32 %s13, 1
        // Predicated region
        $region13: #{tpu_custom_call.1} parent=11 // pred_check
          %p143 = pneg %p60
        $region14: #{tpu_custom_call.1} parent=11 // pred_check_branch
          %145 = sbr.rel (%p143) target = $region16
        $region15: #{tpu_custom_call.1} parent=11 // pred_region
          _
        $region16: #{tpu_custom_call.1} parent=11 // pred_fallthru
          _
        // Predicated region
        $region17: #{tpu_custom_call.1} parent=11 // pred_check
          %p146 = pneg %p81
        $region18: #{tpu_custom_call.1} parent=11 // pred_check_branch
          %148 = sbr.rel (%p146) target = $region20
        $region19: #{tpu_custom_call.1} parent=11 // pred_region
          _
        $region20: #{tpu_custom_call.1} parent=11 // pred_fallthru
          _
        // Predicated region
        $region21: #{tpu_custom_call.1} parent=11 // pred_check
          %p149 = pneg %p102
        $region22: #{tpu_custom_call.1} parent=11 // pred_check_branch
          %151 = sbr.rel (%p149) target = $region24
        $region23: #{tpu_custom_call.1} parent=11 // pred_region
          _
        $region24: #{tpu_custom_call.1} parent=11 // pred_fallthru
          _
      $region12: #{tpu_custom_call.1} parent=5 // pred_fallthru
        _
      %p152 = scmp.lt.s32.totalorder %s13, 2
      // Predicated region
      $region25: #{tpu_custom_call.1} parent=5 // pred_check
        %p153 = pneg %p152
      $region26: #{tpu_custom_call.1} parent=5 // pred_check_branch
        %155 = sbr.rel (%p153) target = $region28
      $region27: #{tpu_custom_call.1} parent=5 // pred_region
        // Predicated region
        $region29: #{tpu_custom_call.1} parent=27 // pred_check
          %p156 = pneg %p33
        $region30: #{tpu_custom_call.1} parent=27 // pred_check_branch
          %158 = sbr.rel (%p156) target = $region32
        $region31: #{tpu_custom_call.1} parent=27 // pred_region
          %p159 = scmp.lt.s32.totalorder %s13, 1
          %s160 = scalar_select %p159, %s13, 1
          %s161 = smul.addr %s160, 2
          %s162 = smul.addr %s161, 4
          %s163 = scalar_lea.vmem %s0, %s162
        $region32: #{tpu_custom_call.1} parent=27 // pred_fallthru
          _
      $region28: #{tpu_custom_call.1} parent=5 // pred_fallthru
        _
      %p164 = scmp.le.s32.totalorder 1, %s13
      %p165 = scmp.lt.s32.totalorder %s13, 3
      %p166 = pnand %p164, %p165
      %p167 = pneg %p166
      // Predicated region
      $region33: #{tpu_custom_call.1} parent=5 // pred_check
        _
      $region34: #{tpu_custom_call.1} parent=5 // pred_check_branch
        %169 = sbr.rel (%p166) target = $region36
      $region35: #{tpu_custom_call.1} parent=5 // pred_region
        %s170 = ssub.s32 %s13, 1
        %p171 = scmp.lt.s32.totalorder %s18, 1
        %s172 = scalar_select %p171, %s18, 1
        %s173 = smul.addr %s172, 2
        %s174 = smul.addr %s173, 4
        %s175 = scalar_lea.vmem %s0, %s174
        %p176 = pneg %p39
        %p177 = pneg %p36
        %p178 = pneg %p60
        %p179 = pneg %p57
        %p180 = pneg %p81
        %p181 = pneg %p78
        %p182 = pneg %p102
        %p183 = pneg %p99
        %p184 = pneg %p128
        %p185 = pneg %p125
        %s186 = sand.u32 %s115, 1
        %s187 = scalar_lea.sflag [#allocation4], %s186
        %s188 = sand.u32 %s115, 1
        %s189 = smul.addr %s188, 16
        %s190 = scalar_lea.vmem [#allocation3], %s189
        %p191 = scmp.lt.s32.totalorder %s18, 1
        %s192 = scalar_select %p191, %s18, 1
        %s193 = smul.addr %s192, 2
        %s194 = smul.addr %s193, 4
        %s195 = scalar_lea.vmem %s0, %s194
        %197 = vst [vmem:[#allocation2] sm:$0xff] 0.0
        %198 = vst [vmem:[#allocation2 + $0x8] sm:$0xff] 0.0
        %199 = vst [vmem:[#allocation2 + $0x10] sm:$0xff] 0.0
        %200 = vst [vmem:[#allocation2 + $0x18] sm:$0xff] 0.0
        %201 = vst [vmem:[#allocation2 + $0x20] sm:$0xff] 0.0
        %202 = vst [vmem:[#allocation2 + $0x28] sm:$0xff] 0.0
        %203 = vst [vmem:[#allocation2 + $0x30] sm:$0xff] 0.0
        %204 = vst [vmem:[#allocation2 + $0x38] sm:$0xff] 0.0
        %205 = vst [vmem:[#allocation2 + $0x40] sm:$0xf] 0.0
        %206 = vst [vmem:[#allocation2 + $0x48] sm:$0xf] 0.0
        %v207 = vld [vmem:[%s195] sm:$0xff]
        %v208 = vld [vmem:[%s3] sm:$0x3]
        %v210 = vlaneseq
        %v211 = vshrl.u32 %v210, 7
        %v212 = vsub.s32 0, %v211
        %v213 = vrot.slane %v208, %v212
        %v214 = vlaneseq
        %v215 = vshrl.u32 %v214, 7
        %v216 = vsub.s32 1, %v215
        %v217 = vrot.slane %v208, %v216
        %v218 = vcombine.low %v213, %v217
        %219 = vrot.lane.b32.xlu0 %v218, 111
        %v220 = vpop.permute.xlu0 %219
        %v221 = vrot.slane %v220, 4
        %vm222 = vcmask 908288
        %v223 = vsel %vm222, %v220, %v221
        %v225 = vmul.f32 %v207, %v223
        %v227 = vcombine.high %v225, %v225
        %228 = vrot.lane.b32.xlu0 %v225, 17
        %v229 = vpop.permute.xlu0 %228
        %230 = vrot.lane.b32.xlu0 %v227, 17
        %v231 = vpop.permute.xlu0 %230
        %vm232 = vcmask 138240
        %v233 = vsel %vm232, %v229, %v231
        %vm236 = vcmask 1043592
        %237 = vst.msk [vmem:[#allocation2] sm:$0xf] %vm236, %v229
        %238 = vst [vmem:[#allocation2 + $0x8] sm:$0xf] %v233
        %v239 = vld [vmem:[%s195] sm:$0xff]
        %v241 = vcombine.low %v239, %v239
        %242 = vrot.lane.b32.xlu0 %v241, 16
        %v243 = vpop.permute.xlu0 %242
        %244 = vrot.lane.b32.xlu0 %v239, 16
        %v245 = vpop.permute.xlu0 %244
        %vm246 = vcmask 130048
        %v247 = vsel %vm246, %v243, %v245
        %vm250 = vcmask 1047684
        %251 = vst.msk [vmem:[#allocation2] sm:$0xf0] %vm250, %v243
        %252 = vst [vmem:[#allocation2 + $0x8] sm:$0xf0] %v247
        %v253 = vld [vmem:[%s195] sm:$0xff]
        %s254 = scalar_lea.vmem %s3, 2
        %v255 = vld [vmem:[%s254] sm:$0x3]
        %v257 = vlaneseq
        %v258 = vshrl.u32 %v257, 7
        %v259 = vsub.s32 0, %v258
        %v260 = vrot.slane %v255, %v259
        %v261 = vlaneseq
        %v262 = vshrl.u32 %v261, 7
        %v263 = vsub.s32 1, %v262
        %v264 = vrot.slane %v255, %v263
        %v265 = vcombine.low %v260, %v264
        %266 = vrot.lane.b32.xlu0 %v265, 113
        %v267 = vpop.permute.xlu0 %266
        %v268 = vrot.slane %v267, 4
        %vm269 = vcmask 924672
        %v270 = vsel %vm269, %v267, %v268
        %v272 = vmul.f32 %v253, %v270
        %v274 = vcombine.high %v272, %v272
        %275 = vrot.lane.b32.xlu0 %v272, 15
        %v276 = vpop.permute.xlu0 %275
        %277 = vrot.lane.b32.xlu0 %v274, 15
        %v278 = vpop.permute.xlu0 %277
        %vm279 = vcmask 121856
        %v280 = vsel %vm279, %v276, %v278
        %vm283 = vcmask 1043576
        %284 = vst.msk [vmem:[#allocation2 + $0x10] sm:$0xf] %vm283, %v276
        %285 = vst [vmem:[#allocation2 + $0x18] sm:$0xf] %v280
        %v286 = vld [vmem:[%s195] sm:$0xff]
        %v287 = vld [vmem:[%s3] sm:$0x3]
        %v289 = vlaneseq
        %v290 = vshrl.u32 %v289, 7
        %v291 = vsub.s32 0, %v290
        %v292 = vrot.slane %v287, %v291
        %v293 = vlaneseq
        %v294 = vshrl.u32 %v293, 7
        %v295 = vsub.s32 1, %v294
        %v296 = vrot.slane %v287, %v295
        %v297 = vcombine.low %v292, %v296
        %298 = vrot.lane.b32.xlu0 %v297, 127
        %v299 = vpop.permute.xlu0 %298
        %v300 = vrot.slane %v299, 4
        %vm301 = vcmask 1039360
        %v302 = vsel %vm301, %v299, %v300
        %v304 = vmul.f32 %v286, %v302
        %v306 = vcombine.low %v304, %v304
        %307 = vrot.lane.b32.xlu0 %v306, 1
        %v308 = vpop.permute.xlu0 %307
        %309 = vrot.lane.b32.xlu0 %v304, 1
        %v310 = vpop.permute.xlu0 %309
        %vm311 = vcmask 7168
        %v312 = vsel %vm311, %v308, %v310
        %vm315 = vcmask 1047564
        %316 = vst.msk [vmem:[#allocation2 + $0x10] sm:$0xf0] %vm315, %v308
        %317 = vst [vmem:[#allocation2 + $0x18] sm:$0xf0] %v312
        %v318 = vld [vmem:[%s195] sm:$0xff]
        %v320 = vcombine.high %v318, %v318
        %322 = vst [vmem:[#allocation2 + $0x20] sm:$0xf] %v318
        %323 = vst [vmem:[#allocation2 + $0x28] sm:$0xf] %v320
        %v324 = vld [vmem:[%s195] sm:$0xff]
        %v325 = vld [vmem:[%s254] sm:$0x3]
        %v327 = vlaneseq
        %v328 = vshrl.u32 %v327, 7
        %v329 = vsub.s32 0, %v328
        %v330 = vrot.slane %v325, %v329
        %v331 = vlaneseq
        %v332 = vshrl.u32 %v331, 7
        %v333 = vsub.s32 1, %v332
        %v334 = vrot.slane %v325, %v333
        %v335 = vcombine.low %v330, %v334
        %336 = vrot.lane.b32.xlu0 %v335, 1
        %v337 = vpop.permute.xlu0 %336
        %v338 = vrot.slane %v337, 4
        %v339 = vsel %vm311, %v338, %v337
        %v341 = vmul.f32 %v324, %v339
        %v343 = vcombine.low %v341, %v341
        %344 = vrot.lane.b32.xlu0 %v343, 127
        %v345 = vpop.permute.xlu0 %344
        %346 = vrot.lane.b32.xlu0 %v341, 127
        %v347 = vpop.permute.xlu0 %346
        %v348 = vsel %vm301, %v345, %v347
        %351 = vst [vmem:[#allocation2 + $0x20] sm:$0xf0] %v348
        %vm352 = vcmask 1039364
        %353 = vst.msk [vmem:[#allocation2 + $0x28] sm:$0xf0] %vm352, %v347
        %v354 = vld [vmem:[%s195] sm:$0xff]
        %v355 = vld [vmem:[%s3] sm:$0x3]
        %v357 = vlaneseq
        %v358 = vshrl.u32 %v357, 7
        %v359 = vsub.s32 0, %v358
        %v360 = vrot.slane %v355, %v359
        %v361 = vlaneseq
        %v362 = vshrl.u32 %v361, 7
        %v363 = vsub.s32 1, %v362
        %v364 = vrot.slane %v355, %v363
        %v365 = vcombine.low %v360, %v364
        %366 = vrot.lane.b32.xlu0 %v365, 15
        %v367 = vpop.permute.xlu0 %366
        %v368 = vrot.slane %v367, 4
        %v369 = vsel %vm279, %v368, %v367
        %v371 = vmul.f32 %v354, %v369
        %v373 = vcombine.high %v371, %v371
        %374 = vrot.lane.b32.xlu0 %v371, 113
        %v375 = vpop.permute.xlu0 %374
        %376 = vrot.lane.b32.xlu0 %v373, 113
        %v377 = vpop.permute.xlu0 %376
        %v378 = vsel %vm269, %v375, %v377
        %381 = vst [vmem:[#allocation2 + $0x30] sm:$0xf] %v378
        %vm382 = vcmask 920576
        %383 = vst.msk [vmem:[#allocation2 + $0x38] sm:$0xf] %vm382, %v377
        %v384 = vld [vmem:[%s195] sm:$0xff]
        %v386 = vcombine.low %v384, %v384
        %387 = vrot.lane.b32.xlu0 %v386, 112
        %v388 = vpop.permute.xlu0 %387
        %389 = vrot.lane.b32.xlu0 %v384, 112
        %v390 = vpop.permute.xlu0 %389
        %vm391 = vcmask 916480
        %v392 = vsel %vm391, %v388, %v390
        %395 = vst [vmem:[#allocation2 + $0x30] sm:$0xf0] %v392
        %vm396 = vcmask 916484
        %397 = vst.msk [vmem:[#allocation2 + $0x38] sm:$0xf0] %vm396, %v390
        %v398 = vld [vmem:[%s195] sm:$0xff]
        %v399 = vld [vmem:[%s254] sm:$0x3]
        %v401 = vlaneseq
        %v402 = vshrl.u32 %v401, 7
        %v403 = vsub.s32 0, %v402
        %v404 = vrot.slane %v399, %v403
        %v405 = vlaneseq
        %v406 = vshrl.u32 %v405, 7
        %v407 = vsub.s32 1, %v406
        %v408 = vrot.slane %v399, %v407
        %v409 = vcombine.low %v404, %v408
        %410 = vrot.lane.b32.xlu0 %v409, 17
        %v411 = vpop.permute.xlu0 %410
        %v412 = vrot.slane %v411, 4
        %v413 = vsel %vm232, %v412, %v411
        %v415 = vmul.f32 %v398, %v413
        %v417 = vcombine.high %v415, %v415
        %418 = vrot.lane.b32.xlu0 %v415, 111
        %v419 = vpop.permute.xlu0 %418
        %420 = vrot.lane.b32.xlu0 %v417, 111
        %v421 = vpop.permute.xlu0 %420
        %v422 = vsel %vm222, %v419, %v421
        %425 = vst [vmem:[#allocation2 + $0x40] sm:$0xf] %v422
        %vm426 = vcmask 904192
        %427 = vst.msk [vmem:[#allocation2 + $0x48] sm:$0xf] %vm426, %v421
        %v428 = vld [vmem:[%s1] sm:$0xf]
        %v429 = vld [vmem:[#allocation2] sm:$0xff]
        %v430 = vld [vmem:[#allocation2 + $0x8] sm:$0xff]
        %v431 = vld [vmem:[#allocation2 + $0x10] sm:$0xff]
        %v432 = vld [vmem:[#allocation2 + $0x18] sm:$0xff]
        %v433 = vld [vmem:[#allocation2 + $0x20] sm:$0xff]
        %v434 = vld [vmem:[#allocation2 + $0x28] sm:$0xff]
        %v435 = vld [vmem:[#allocation2 + $0x30] sm:$0xff]
        %v436 = vld [vmem:[#allocation2 + $0x38] sm:$0xff]
        %v437 = vld [vmem:[#allocation2 + $0x40] sm:$0xf]
        %v438 = vld [vmem:[#allocation2 + $0x48] sm:$0xf]
        %v439 = vpack.c.bf16 %v431, %v429
        %v440 = vpack.c.bf16 %v432, %v430
        %v441 = vpack.c.bf16 %v435, %v433
        %v442 = vpack.c.bf16 %v436, %v434
        %v443 = vpack.c.bf16 %v437, %v437
        %v444 = vpack.c.bf16 %v438, %v438
        %vm445 = vcmask 293888
        %v447 = vsel %vm445, %v428, 0
        %vm449 = vcmask 1041408
        %v451 = vsel %vm449, %v443, 0
        %v454 = vsel %vm449, %v444, 0
        %456 = vmatprep.subr.bf16.mxu0 %v440
        %457 = vmatpush1.bf16.msra.mxu0 %v439
        %458 = vmatprep.subr.bf16.mxu0 %v442
        %459 = vmatpush1.bf16.msra.mxu0 %v441
        %460 = vmatprep.subr.bf16.mxu0 %v454
        %461 = vmatpush1.bf16.msra.mxu0 %v451
        %462 = vmatprep.subr.bf16.mxu0 0
        %463 = vmatpush1.bf16.msra.mxu0 0
        %464 = vmatprep.subr.bf16.mxu0 0
        %465 = vmatpush1.bf16.msra.mxu0 0
        %466 = vmatprep.subr.bf16.mxu0 0
        %467 = vmatpush1.bf16.msra.mxu0 0
        %468 = vmatprep.subr.bf16.mxu0 0
        %469 = vmatpush1.bf16.msra.mxu0 0
        %470 = vmatprep.subr.bf16.mxu0 0
        %471 = vmatpush1.bf16.msra.mxu0 0
        %472 = vmatprep.subr.bf16.mxu0 0
        %473 = vmatpush1.bf16.msra.mxu0 0
        %474 = vmatprep.subr.bf16.mxu0 0
        %475 = vmatpush1.bf16.msra.mxu0 0
        %476 = vmatprep.subr.bf16.mxu0 0
        %477 = vmatpush1.bf16.msra.mxu0 0
        %478 = vmatprep.subr.bf16.mxu0 0
        %479 = vmatpush1.bf16.msra.mxu0 0
        %480 = vmatprep.subr.bf16.mxu0 0
        %481 = vmatpush1.bf16.msra.mxu0 0
        %482 = vmatprep.subr.bf16.mxu0 0
        %483 = vmatpush1.bf16.msra.mxu0 0
        %484 = vmatprep.subr.bf16.mxu0 0
        %485 = vmatpush1.bf16.msra.mxu0 0
        %486 = vmatprep.subr.bf16.mxu0 0
        %487 = vmatpush1.bf16.msra.mxu0 0
        %488 = vmatprep.mubr.bf16.mxu0 0
        %489 = vmatmul.mubr.bf16.gmra.mrb[0].mxu0 %v447
        %v490 = vpop.f32.mrb[0].mxu0
        %v491 = vadd.f32 0.0, %v490
        %v492 = vpop.f32.mrb[0].mxu0
        %v493 = vadd.f32 0.0, %v492
        %v494 = vpop.f32.mrb[0].mxu0
        %v495 = vpop.f32.mrb[0].mxu0
        %496 = vdwg.mxu0
        %v497 = vld [vmem:[%s2] sm:$0xff]
        %499 = vset.pattern.permute.xlu0 0
        %500 = vperm.xlu0 %499, %v497
        %v501 = vpop.permute.xlu0 %500
        %v503 = vmul.f32 %v491, %v501
        %v504 = vmul.f32 %v493, %v501
        %s505 = scalar_lea.vmem %s2, 8
        %v506 = vld [vmem:[%s505] sm:$0xff]
        %508 = vset.pattern.permute.xlu0 0
        %509 = vperm.xlu0 %508, %v506
        %v510 = vpop.permute.xlu0 %509
        %v512 = vadd.f32 %v503, %v510
        %v513 = vadd.f32 %v504, %v510
        %v514 = vmax.f32 %v512, 0.0
        %v515 = vmax.f32 %v513, 0.0
        %516 = vst [vmem:[%s190] sm:$0xff] %v514
        %517 = vst [vmem:[%s190 + $0x8] sm:$0xff] %v515
        %s518 = sand.u32 %s115, 1
        %s519 = scalar_lea.sflag [#allocation4], %s518
        %s520 = sand.u32 %s115, 1
        %s521 = smul.addr %s520, 16
        %s522 = scalar_lea.vmem [#allocation3], %s521
        // Predicated region
        $region37: #{tpu_custom_call.1} parent=35 // pred_check
          %p523 = pneg %p125
        $region38: #{tpu_custom_call.1} parent=35 // pred_check_branch
          %525 = sbr.rel (%p523) target = $region40
        $region39: #{tpu_custom_call.1} parent=35 // pred_region
          %s527 = ssub.s32 256, 256
          %528 = vsyncadd %s519, %s527
          %s529 = smul.addr %s18, 2
          %s530 = smul.addr %s529, 128
          %s531 = scalar_lea.hbm %s4, %s530
          %s533 = sshll.u32 %s522, 4
          %s534 = int_to_ptr.vmem [resolvable:$true] %s533
          %536 = dma.vmem_to_hbm [thread:$0]  %s534, 256, %s531, %s519
        $region40: #{tpu_custom_call.1} parent=35 // pred_fallthru
          _
      $region36: #{tpu_custom_call.1} parent=5 // pred_fallthru
        _
      %p537 = scmp.le.s32.totalorder 2, %s13
      // Predicated region
      $region41: #{tpu_custom_call.1} parent=5 // pred_check
        %p538 = pneg %p537
      $region42: #{tpu_custom_call.1} parent=5 // pred_check_branch
        %540 = sbr.rel (%p538) target = $region44
      $region43: #{tpu_custom_call.1} parent=5 // pred_region
        %s541 = ssub.s32 %s13, 2
        // Predicated region
        $region45: #{tpu_custom_call.1} parent=43 // pred_check
          %p542 = pneg %p131
        $region46: #{tpu_custom_call.1} parent=43 // pred_check_branch
          %544 = sbr.rel (%p542) target = $region48
        $region47: #{tpu_custom_call.1} parent=43 // pred_region
          %s545 = sand.u32 %s116, 1
          %s546 = scalar_lea.sflag [#allocation4], %s545
          %s547 = sand.u32 %s116, 1
          %s548 = smul.addr %s547, 16
          %s549 = scalar_lea.vmem [#allocation3], %s548
          %550 = dma.done %s546, 256
        $region48: #{tpu_custom_call.1} parent=43 // pred_fallthru
          _
      $region44: #{tpu_custom_call.1} parent=5 // pred_fallthru
        _
    $region6: #{tpu_custom_call.1} parent=1 // loop_footer
      %s17 = sadd.s32 1, %s13
    $region7: #{tpu_custom_call.1} parent=1 // loop_footer_branch
      %12 = sbr.rel target = $region3
    $region8: #{tpu_custom_call.1} parent=1 // loop_exit
      _
    %551 = vsyncpa [#allocation4], 1
    %s552 = scalar_lea.sflag [#allocation4], 1
    %553 = vsyncpa %s552, 1

</llo_original>
